<compile_context>
chip_gen: v5e
topology: v5e:2x2
jax: 0.10.0
libtpu: 0.0.40
codegen_flags: <defaults>
</compile_context>

<pallas_src>
import functools

import jax
import jax.numpy as jnp
from jax.experimental import pallas as pl
from jax.experimental.pallas import tpu as pltpu


# ----------------------------- Pallas kernel ------------------------------ #
def actor_kernel(f_ref, m_ref, wm_ref, w1_ref, w234_ref, b_ref, o_ref, *,
                 mdim, fp, hp):
    # Packed bias layout along lanes: [ bm(fp) | b1(hp) | b2(hp) | b3(hp) | b4(hp) ]
    bm = b_ref[:, 0:fp]
    b1 = b_ref[:, fp:fp + hp]
    b2 = b_ref[:, fp + hp:fp + 2 * hp]
    b3 = b_ref[:, fp + 2 * hp:fp + 3 * hp]
    b4 = b_ref[:, fp + 3 * hp:fp + 4 * hp]

    # fcm on the VPU: sigmoid(m @ wm + bm) as `mdim` broadcast FMAs.
    # K is only 4, so an MXU contraction here would be ~97% wasted work.
    m = m_ref[...]            # (TB, mdim)
    wm = wm_ref[...]          # (mdim, fp)
    logits = bm               # (1, fp) -> broadcasts to (TB, fp)
    for k in range(mdim):     # static unroll (mdim = 4)
        logits = logits + m[:, k:k + 1] * wm[k:k + 1, :]
    attn = jax.nn.sigmoid(logits)                              # (TB, fp)

    h = f_ref[...] * attn                                      # (TB, fp)
    h = jax.nn.relu(
        jnp.dot(h, w1_ref[...], preferred_element_type=jnp.float32) + b1)
    h = jax.nn.relu(
        jnp.dot(h, w234_ref[0], preferred_element_type=jnp.float32) + b2)
    h = jax.nn.relu(
        jnp.dot(h, w234_ref[1], preferred_element_type=jnp.float32) + b3)
    o_ref[...] = jnp.tanh(
        jnp.dot(h, w234_ref[2], preferred_element_type=jnp.float32) + b4)


# ------------------------------- Wrapper ----------------------------------- #
def _round_up(x, n):
    return ((x + n - 1) // n) * n


def _pad2(x, shape):
    return jnp.pad(x, [(0, s - d) for d, s in zip(x.shape, shape)])


def prepare_actor_params(params):
    """Pad / pack all weights and biases once (NOT in the per-call path)."""
    wm, bm = params["fcm"]        # (M, F), (F,)
    w1, b1 = params["fc1"]        # (F, 100), (100,)
    w2, b2 = params["fc2"]        # (100, 50)
    w3, b3 = params["fc3"]        # (50, 10)
    w4, b4 = params["fc4"]        # (10, A)
    M, F = wm.shape
    A = w4.shape[1]
    Fp = _round_up(F, 128)
    HP = _round_up(max(w1.shape[1], w2.shape[1], w3.shape[1], w4.shape[1]), 128)

    wm_p = _pad2(wm, (M, Fp))                          # keep K = M unpadded
    w1_p = _pad2(w1, (Fp, HP))
    w234 = jnp.stack([_pad2(w2, (HP, HP)),
                      _pad2(w3, (HP, HP)),
                      _pad2(w4, (HP, HP))])            # (3, HP, HP)
    biases = jnp.concatenate([
        jnp.pad(bm, (0, Fp - bm.shape[0])),
        jnp.pad(b1, (0, HP - b1.shape[0])),
        jnp.pad(b2, (0, HP - b2.shape[0])),
        jnp.pad(b3, (0, HP - b3.shape[0])),
        jnp.pad(b4, (0, HP - b4.shape[0])),
    ]).reshape(1, -1)                                  # (1, Fp + 4*HP)

    dims = dict(M=int(M), F=int(F), A=int(A), Fp=int(Fp), HP=int(HP))
    return dict(wm=wm_p, w1=w1_p, w234=w234, biases=biases, dims=dims)


def tinycar_actor_forward(f, m, prepped, *, max_batch_tile=256):
    """f: (B, F) f32, m: (B, M) f32 -> (B, A) f32."""
    dims = prepped["dims"]
    M, F, A, Fp, HP = dims["M"], dims["F"], dims["A"], dims["Fp"], dims["HP"]
    B = f.shape[0]
    assert f.shape[1] == F and m.shape[1] == M

    # Adaptive batch tile: fill the MXU M dim (up to 256 rows / grid step) and
    # keep >= 2 grid steps for large batches so the 'parallel' axis can shard
    # across v7x's two TensorCores. Always a multiple of 8 (sublane).
    TB = min(max_batch_tile, _round_up(B, 8))
    Bp = _round_up(B, TB)

    # Per-call padding: batch dim only (feature dims already handled at prep).
    f_p = _pad2(f, (Bp, Fp))
    m_p = _pad2(m, (Bp, M))

    kernel = functools.partial(actor_kernel, mdim=M, fp=Fp, hp=HP)

    flops = 2 * Bp * (M * Fp + Fp * HP + 3 * HP * HP)
    bytes_accessed = 4 * (f_p.size + m_p.size + prepped["wm"].size
                          + prepped["w1"].size + prepped["w234"].size
                          + prepped["biases"].size + Bp * HP)
    cost = pl.CostEstimate(flops=int(flops),
                           transcendentals=int(Bp * (Fp + HP)),
                           bytes_accessed=int(bytes_accessed))

    out_p = pl.pallas_call(
        kernel,
        out_shape=jax.ShapeDtypeStruct((Bp, HP), jnp.float32),
        grid_spec=pltpu.PrefetchScalarGridSpec(
            num_scalar_prefetch=0,
            grid=(Bp // TB,),
            in_specs=[
                pl.BlockSpec((TB, Fp), lambda i: (i, 0)),         # f
                pl.BlockSpec((TB, M), lambda i: (i, 0)),          # m (K unpadded)
                pl.BlockSpec((M, Fp), lambda i: (0, 0)),          # wm
                pl.BlockSpec((Fp, HP), lambda i: (0, 0)),         # w1
                pl.BlockSpec((3, HP, HP), lambda i: (0, 0, 0)),   # w2|w3|w4 fused
                pl.BlockSpec((1, Fp + 4 * HP), lambda i: (0, 0)), # packed biases
            ],
            out_specs=pl.BlockSpec((TB, HP), lambda i: (i, 0)),
        ),
        compiler_params=pltpu.CompilerParams(
            dimension_semantics=("parallel",)),
        cost_estimate=cost,
    )(f_p, m_p, prepped["wm"], prepped["w1"], prepped["w234"],
      prepped["biases"])

    return out_p[:B, :A]


# -------------------------- Parameter initialization ----------------------- #
def init_linear(key, fan_in, fan_out):
    """Deterministic init mimicking nn.Linear default: U(-1/sqrt(fan_in), +)."""
    kw, kb = jax.random.split(key)
    bound = 1.0 / jnp.sqrt(fan_in)
    w = jax.random.uniform(kw, (fan_in, fan_out), jnp.float32, -bound, bound)
    b = jax.random.uniform(kb, (fan_out,), jnp.float32, -bound, bound)
    return w, b


def init_actor_params(key, in_features=256, maneuver_dim=4, action_dim=1):
    keys = jax.random.split(key, 5)
    return {
        "fcm": init_linear(keys[0], maneuver_dim, in_features),
        "fc1": init_linear(keys[1], in_features, 100),
        "fc2": init_linear(keys[2], 100, 50),
        "fc3": init_linear(keys[3], 50, 10),
        "fc4": init_linear(keys[4], 10, action_dim),
    }


# ------------------------------ Reference ---------------------------------- #
def reference_forward(f, m, params):
    wm, bm = params["fcm"]
    w1, b1 = params["fc1"]
    w2, b2 = params["fc2"]
    w3, b3 = params["fc3"]
    w4, b4 = params["fc4"]
    attn = jax.nn.sigmoid(m @ wm + bm)
    h = f * attn
    h = jax.nn.relu(h @ w1 + b1)
    h = jax.nn.relu(h @ w2 + b2)
    h = jax.nn.relu(h @ w3 + b3)
    return jnp.tanh(h @ w4 + b4)


# --------------------------------- Main ------------------------------------ #
if __name__ == "__main__":
    key = jax.random.PRNGKey(0)
    k_params, k_f, k_m, k_f2, k_m2 = jax.random.split(key, 5)

    IN_FEATURES = 256   # TinycarEncoder.FEATURE_VEC_SIZE
    M_DIM = 4           # DEFAULT_M_DIM
    A_DIM = 1           # DEFAULT_A_DIM

    params = init_actor_params(k_params, IN_FEATURES, M_DIM, A_DIM)
    prepped = prepare_actor_params(params)   # pad/pack weights ONCE

    # Small case (matches the module's example scale): batch = 2.
    B = 2
    f = jax.random.normal(k_f, (B, IN_FEATURES), jnp.float32)
    m = jax.random.normal(k_m, (B, M_DIM), jnp.float32)
    out = jax.block_until_ready(tinycar_actor_forward(f, m, prepped))
    ref = reference_forward(f, m, params)
    assert out.shape == (B, A_DIM)
    assert jnp.allclose(out, ref, atol=1e-5, rtol=1e-5), (out, ref)

    # Larger batch: exercises TB=256 tiles and a multi-step 'parallel' grid.
    B2 = 300
    f2 = jax.random.normal(k_f2, (B2, IN_FEATURES), jnp.float32)
    m2 = jax.random.normal(k_m2, (B2, M_DIM), jnp.float32)
    out2 = jax.block_until_ready(tinycar_actor_forward(f2, m2, prepped))
    ref2 = reference_forward(f2, m2, params)
    assert out2.shape == (B2, A_DIM)
    assert jnp.allclose(out2, ref2, atol=1e-5, rtol=1e-5)

    print("KERNEL_OK")
</pallas_src>

<mosaic_0001>
module attributes {stable_mosaic.version = 11 : i64} {
  func.func @actor_kernel(%arg0: i32, %arg1: memref<8x256xf32, #tpu.memory_space<vmem>>, %arg2: memref<8x4xf32, #tpu.memory_space<vmem>>, %arg3: memref<4x256xf32, #tpu.memory_space<vmem>>, %arg4: memref<256x128xf32, #tpu.memory_space<vmem>>, %arg5: memref<3x128x128xf32, #tpu.memory_space<vmem>>, %arg6: memref<1x768xf32, #tpu.memory_space<vmem>>, %arg7: memref<8x128xf32, #tpu.memory_space<vmem>>) attributes {dimension_semantics = [#tpu.dimension_semantics<parallel>], iteration_bounds = array<i64: 1>, scalar_prefetch = 0 : i64, scratch_operands = 0 : i64, tpu.core_type = #tpu.core_type<tc>, window_params = [{transform_indices = @transform_0, window_bounds = array<i64: 8, 256>}, {transform_indices = @transform_1, window_bounds = array<i64: 8, 4>}, {pipeline_mode = #tpu.pipeline_mode<synchronous>, transform_indices = @transform_2, window_bounds = array<i64: 4, 256>}, {pipeline_mode = #tpu.pipeline_mode<synchronous>, transform_indices = @transform_3, window_bounds = array<i64: 256, 128>}, {pipeline_mode = #tpu.pipeline_mode<synchronous>, transform_indices = @transform_4, window_bounds = array<i64: 3, 128, 128>}, {pipeline_mode = #tpu.pipeline_mode<synchronous>, transform_indices = @transform_5, window_bounds = array<i64: 1, 768>}, {transform_indices = @transform_6, window_bounds = array<i64: 8, 128>}]} {
    %c0 = arith.constant 0 : index
    %c0_0 = arith.constant 0 : index
    %0 = vector.load %arg6[%c0, %c0_0] : memref<1x768xf32, #tpu.memory_space<vmem>>, vector<1x256xf32>
    %c0_1 = arith.constant 0 : index
    %c256 = arith.constant 256 : index
    %1 = vector.load %arg6[%c0_1, %c256] : memref<1x768xf32, #tpu.memory_space<vmem>>, vector<1x128xf32>
    %c0_2 = arith.constant 0 : index
    %c384 = arith.constant 384 : index
    %2 = vector.load %arg6[%c0_2, %c384] : memref<1x768xf32, #tpu.memory_space<vmem>>, vector<1x128xf32>
    %c0_3 = arith.constant 0 : index
    %c512 = arith.constant 512 : index
    %3 = vector.load %arg6[%c0_3, %c512] : memref<1x768xf32, #tpu.memory_space<vmem>>, vector<1x128xf32>
    %c0_4 = arith.constant 0 : index
    %c640 = arith.constant 640 : index
    %4 = vector.load %arg6[%c0_4, %c640] : memref<1x768xf32, #tpu.memory_space<vmem>>, vector<1x128xf32>
    %c0_5 = arith.constant 0 : index
    %c0_6 = arith.constant 0 : index
    %5 = vector.load %arg2[%c0_5, %c0_6] : memref<8x4xf32, #tpu.memory_space<vmem>>, vector<8x4xf32>
    %c0_7 = arith.constant 0 : index
    %c0_8 = arith.constant 0 : index
    %6 = vector.load %arg3[%c0_7, %c0_8] : memref<4x256xf32, #tpu.memory_space<vmem>>, vector<4x256xf32>
    %7 = vector.extract_strided_slice %5 {offsets = [0, 0], sizes = [8, 1], strides = [1, 1]} : vector<8x4xf32> to vector<8x1xf32>
    %8 = vector.extract_strided_slice %6 {offsets = [0, 0], sizes = [1, 256], strides = [1, 1]} : vector<4x256xf32> to vector<1x256xf32>
    %9 = vector.broadcast %7 : vector<8x1xf32> to vector<8x256xf32>
    %10 = vector.broadcast %8 : vector<1x256xf32> to vector<8x256xf32>
    %11 = arith.mulf %9, %10 : vector<8x256xf32>
    %12 = vector.broadcast %0 : vector<1x256xf32> to vector<8x256xf32>
    %13 = arith.addf %12, %11 : vector<8x256xf32>
    %14 = vector.extract_strided_slice %5 {offsets = [0, 1], sizes = [8, 1], strides = [1, 1]} : vector<8x4xf32> to vector<8x1xf32>
    %15 = vector.extract_strided_slice %6 {offsets = [1, 0], sizes = [1, 256], strides = [1, 1]} : vector<4x256xf32> to vector<1x256xf32>
    %16 = vector.broadcast %14 : vector<8x1xf32> to vector<8x256xf32>
    %17 = vector.broadcast %15 : vector<1x256xf32> to vector<8x256xf32>
    %18 = arith.mulf %16, %17 : vector<8x256xf32>
    %19 = arith.addf %13, %18 : vector<8x256xf32>
    %20 = vector.extract_strided_slice %5 {offsets = [0, 2], sizes = [8, 1], strides = [1, 1]} : vector<8x4xf32> to vector<8x1xf32>
    %21 = vector.extract_strided_slice %6 {offsets = [2, 0], sizes = [1, 256], strides = [1, 1]} : vector<4x256xf32> to vector<1x256xf32>
    %22 = vector.broadcast %20 : vector<8x1xf32> to vector<8x256xf32>
    %23 = vector.broadcast %21 : vector<1x256xf32> to vector<8x256xf32>
    %24 = arith.mulf %22, %23 : vector<8x256xf32>
    %25 = arith.addf %19, %24 : vector<8x256xf32>
    %26 = vector.extract_strided_slice %5 {offsets = [0, 3], sizes = [8, 1], strides = [1, 1]} : vector<8x4xf32> to vector<8x1xf32>
    %27 = vector.extract_strided_slice %6 {offsets = [3, 0], sizes = [1, 256], strides = [1, 1]} : vector<4x256xf32> to vector<1x256xf32>
    %28 = vector.broadcast %26 : vector<8x1xf32> to vector<8x256xf32>
    %29 = vector.broadcast %27 : vector<1x256xf32> to vector<8x256xf32>
    %30 = arith.mulf %28, %29 : vector<8x256xf32>
    %31 = arith.addf %25, %30 : vector<8x256xf32>
    %32 = arith.negf %31 : vector<8x256xf32>
    %33 = math.exp %32 : vector<8x256xf32>
    %cst = arith.constant 1.000000e+00 : f32
    %34 = vector.broadcast %cst : f32 to vector<8x256xf32>
    %35 = arith.addf %34, %33 : vector<8x256xf32>
    %36 = arith.divf %34, %35 : vector<8x256xf32>
    %c0_9 = arith.constant 0 : index
    %c0_10 = arith.constant 0 : index
    %37 = vector.load %arg1[%c0_9, %c0_10] : memref<8x256xf32, #tpu.memory_space<vmem>>, vector<8x256xf32>
    %38 = arith.mulf %37, %36 : vector<8x256xf32>
    %c0_11 = arith.constant 0 : index
    %c0_12 = arith.constant 0 : index
    %39 = vector.load %arg4[%c0_11, %c0_12] : memref<256x128xf32, #tpu.memory_space<vmem>>, vector<256x128xf32>
    %cst_13 = arith.constant dense<0.000000e+00> : vector<8x128xf32>
    %40 = tpu.matmul %38, %39, %cst_13 {dimension_numbers = #tpu.dot_dimension_numbers<[1], [0], [0], [1], [0, 0, 1, 1], [], []>} : vector<8x256xf32>, vector<256x128xf32>, vector<8x128xf32> -> vector<8x128xf32>
    %41 = vector.broadcast %1 : vector<1x128xf32> to vector<8x128xf32>
    %42 = arith.addf %40, %41 : vector<8x128xf32>
    %cst_14 = arith.constant 0.000000e+00 : f32
    %43 = vector.broadcast %cst_14 : f32 to vector<8x128xf32>
    %44 = arith.maximumf %42, %43 : vector<8x128xf32>
    %c0_15 = arith.constant 0 : index
    %c0_16 = arith.constant 0 : index
    %c0_17 = arith.constant 0 : index
    %45 = vector.load %arg5[%c0_15, %c0_16, %c0_17] : memref<3x128x128xf32, #tpu.memory_space<vmem>>, vector<1x128x128xf32>
    %46 = vector.shape_cast %45 : vector<1x128x128xf32> to vector<128x128xf32>
    %cst_18 = arith.constant dense<0.000000e+00> : vector<8x128xf32>
    %47 = tpu.matmul %44, %46, %cst_18 {dimension_numbers = #tpu.dot_dimension_numbers<[1], [0], [0], [1], [0, 0, 1, 1], [], []>} : vector<8x128xf32>, vector<128x128xf32>, vector<8x128xf32> -> vector<8x128xf32>
    %48 = vector.broadcast %2 : vector<1x128xf32> to vector<8x128xf32>
    %49 = arith.addf %47, %48 : vector<8x128xf32>
    %cst_19 = arith.constant 0.000000e+00 : f32
    %50 = vector.broadcast %cst_19 : f32 to vector<8x128xf32>
    %51 = arith.maximumf %49, %50 : vector<8x128xf32>
    %c1 = arith.constant 1 : index
    %c0_20 = arith.constant 0 : index
    %c0_21 = arith.constant 0 : index
    %52 = vector.load %arg5[%c1, %c0_20, %c0_21] : memref<3x128x128xf32, #tpu.memory_space<vmem>>, vector<1x128x128xf32>
    %53 = vector.shape_cast %52 : vector<1x128x128xf32> to vector<128x128xf32>
    %cst_22 = arith.constant dense<0.000000e+00> : vector<8x128xf32>
    %54 = tpu.matmul %51, %53, %cst_22 {dimension_numbers = #tpu.dot_dimension_numbers<[1], [0], [0], [1], [0, 0, 1, 1], [], []>} : vector<8x128xf32>, vector<128x128xf32>, vector<8x128xf32> -> vector<8x128xf32>
    %55 = vector.broadcast %3 : vector<1x128xf32> to vector<8x128xf32>
    %56 = arith.addf %54, %55 : vector<8x128xf32>
    %cst_23 = arith.constant 0.000000e+00 : f32
    %57 = vector.broadcast %cst_23 : f32 to vector<8x128xf32>
    %58 = arith.maximumf %56, %57 : vector<8x128xf32>
    %c2 = arith.constant 2 : index
    %c0_24 = arith.constant 0 : index
    %c0_25 = arith.constant 0 : index
    %59 = vector.load %arg5[%c2, %c0_24, %c0_25] : memref<3x128x128xf32, #tpu.memory_space<vmem>>, vector<1x128x128xf32>
    %60 = vector.shape_cast %59 : vector<1x128x128xf32> to vector<128x128xf32>
    %cst_26 = arith.constant dense<0.000000e+00> : vector<8x128xf32>
    %61 = tpu.matmul %58, %60, %cst_26 {dimension_numbers = #tpu.dot_dimension_numbers<[1], [0], [0], [1], [0, 0, 1, 1], [], []>} : vector<8x128xf32>, vector<128x128xf32>, vector<8x128xf32> -> vector<8x128xf32>
    %62 = vector.broadcast %4 : vector<1x128xf32> to vector<8x128xf32>
    %63 = arith.addf %61, %62 : vector<8x128xf32>
    %64 = math.tanh %63 : vector<8x128xf32>
    %c0_27 = arith.constant 0 : index
    %c0_28 = arith.constant 0 : index
    %65 = vector.load %arg7[%c0_27, %c0_28] : memref<8x128xf32, #tpu.memory_space<vmem>>, vector<8x128xf32>
    tpu.vector_store %arg7[%c0_27, %c0_28], %64 {strides = array<i32>} : memref<8x128xf32, #tpu.memory_space<vmem>>, vector<8x128xf32>,
    return
  }
  func.func @transform_0(%arg0: i32) -> (i32, i32) {
    %c0_i32 = arith.constant 0 : i32
    %c0_i32_0 = arith.constant 0 : i32
    return %arg0, %c0_i32 : i32, i32
  }
  func.func @transform_1(%arg0: i32) -> (i32, i32) {
    %c0_i32 = arith.constant 0 : i32
    %c0_i32_0 = arith.constant 0 : i32
    return %arg0, %c0_i32 : i32, i32
  }
  func.func @transform_2(%arg0: i32) -> (i32, i32) {
    %c0_i32 = arith.constant 0 : i32
    %c0_i32_0 = arith.constant 0 : i32
    %c0_i32_1 = arith.constant 0 : i32
    return %c0_i32, %c0_i32_0 : i32, i32
  }
  func.func @transform_3(%arg0: i32) -> (i32, i32) {
    %c0_i32 = arith.constant 0 : i32
    %c0_i32_0 = arith.constant 0 : i32
    %c0_i32_1 = arith.constant 0 : i32
    return %c0_i32, %c0_i32_0 : i32, i32
  }
  func.func @transform_4(%arg0: i32) -> (i32, i32, i32) {
    %c0_i32 = arith.constant 0 : i32
    %c0_i32_0 = arith.constant 0 : i32
    %c0_i32_1 = arith.constant 0 : i32
    %c0_i32_2 = arith.constant 0 : i32
    return %c0_i32, %c0_i32_0, %c0_i32_1 : i32, i32, i32
  }
  func.func @transform_5(%arg0: i32) -> (i32, i32) {
    %c0_i32 = arith.constant 0 : i32
    %c0_i32_0 = arith.constant 0 : i32
    %c0_i32_1 = arith.constant 0 : i32
    return %c0_i32, %c0_i32_0 : i32, i32
  }
  func.func @transform_6(%arg0: i32) -> (i32, i32) {
    %c0_i32 = arith.constant 0 : i32
    %c0_i32_0 = arith.constant 0 : i32
    return %arg0, %c0_i32 : i32, i32
  }
}

</mosaic_0001>

<llo_original>
// kernel: tpu_custom_call.1
$region0: #{tpu_custom_call.1}
  #allocation0 [shape = 'u32[]', space=smem, size = 0x4, offset = 0x4, fixed_abs, tag = 'smem constant byte address 0x4 - core index']
  #allocation1 [shape = 'u32[72,128]{1,0:T(1,128)}', space=vmem, size = 0x9000, scoped, tag = 'internal scratch']
  %s0 = inlined_call_operand.hbm [shape: f32[8,256], index: 0, kind: input, shape index: {}]
  %s1 = inlined_call_operand.vmem [shape: f32[8,4], index: 1, kind: input, shape index: {}]
  %s2 = inlined_call_operand.vmem [shape: f32[4,256], index: 2, kind: input, shape index: {}]
  %s3 = inlined_call_operand.hbm [shape: f32[256,128], index: 3, kind: input, shape index: {}]
  %s4 = inlined_call_operand.hbm [shape: f32[3,128,128], index: 4, kind: input, shape index: {}]
  %s5 = inlined_call_operand.vmem [shape: f32[1,768], index: 5, kind: input, shape index: {}]
  %s6 = inlined_call_operand.hbm [shape: f32[8,128], index: 6, kind: output, shape index: {}]
  %s7 = sld [smem:[#allocation0]]
  $region46: #{tpu_custom_call.1} parent=0
    _
  %s9 = ssub.s32 1, %s7
  %s10 = scalar_select 0, %s9, %s7
  $region1: #{tpu_custom_call.1} parent=0
    #allocation2 [shape = 'u8[8192]{0}', space=vmem, size = 0x2000, scoped, tag = 'input window, operand 0, single buffered']
    #allocation3 [shape = 's32[1]{0}', space=sflag, size = 0x4, scoped, tag = 'scoped memory for tpu_custom_call.1']
    #allocation4 [shape = 's32[1]{0}', space=sflag, size = 0x4, scoped, tag = 'scoped memory for tpu_custom_call.1']
    #allocation5 [shape = 'u8[131072]{0}', space=vmem, size = 0x20000, scoped, tag = 'input window, operand 3, single buffered']
    #allocation6 [shape = 's32[1]{0}', space=sflag, size = 0x4, scoped, tag = 'scoped memory for tpu_custom_call.1']
    #allocation7 [shape = 'u8[196608]{0}', space=vmem, size = 0x30000, scoped, tag = 'input window, operand 4, single buffered']
    #allocation8 [shape = 'u8[4096]{0}', space=vmem, size = 0x1000, scoped, tag = 'output window, operand 0, single buffered']
    %11 = vsyncpa [#allocation3], 0
    %12 = vsyncpa [#allocation6], 0
    %13 = vsyncpa [#allocation4], 0
    // Predicated region
    $region2: #{tpu_custom_call.1} parent=1 // pred_check
      _
    $region3: #{tpu_custom_call.1} parent=1 // pred_check_branch
      %15 = sbr.rel (0) target = $region5
    $region4: #{tpu_custom_call.1} parent=1 // pred_region
      %17 = vsyncadd [#allocation3], 0
      %s19 = sshll.u32 %s0, 4
      %s20 = int_to_ptr.hbm [resolvable:$true] %s19
      %s21 = sshll.u32 [#allocation2], 4
      %s22 = int_to_ptr.vmem [resolvable:$true] %s21
      %24 = dma.hbm_to_vmem [thread:$0]  %s20, 256, %s22, [#allocation3]
    $region5: #{tpu_custom_call.1} parent=1 // pred_fallthru
      _
    // Predicated region
    $region6: #{tpu_custom_call.1} parent=1 // pred_check
      _
    $region7: #{tpu_custom_call.1} parent=1 // pred_check_branch
      %26 = sbr.rel (0) target = $region9
    $region8: #{tpu_custom_call.1} parent=1 // pred_region
      _
    $region9: #{tpu_custom_call.1} parent=1 // pred_fallthru
      _
    // Predicated region
    $region10: #{tpu_custom_call.1} parent=1 // pred_check
      _
    $region11: #{tpu_custom_call.1} parent=1 // pred_check_branch
      %28 = sbr.rel (0) target = $region13
    $region12: #{tpu_custom_call.1} parent=1 // pred_region
      _
    $region13: #{tpu_custom_call.1} parent=1 // pred_fallthru
      _
    // Predicated region
    $region14: #{tpu_custom_call.1} parent=1 // pred_check
      _
    $region15: #{tpu_custom_call.1} parent=1 // pred_check_branch
      %30 = sbr.rel (0) target = $region17
    $region16: #{tpu_custom_call.1} parent=1 // pred_region
      %32 = vsyncadd [#allocation6], 0
      %s33 = sshll.u32 %s3, 4
      %s34 = int_to_ptr.hbm [resolvable:$true] %s33
      %s35 = sshll.u32 [#allocation5], 4
      %s36 = int_to_ptr.vmem [resolvable:$true] %s35
      %41 = dma.hbm_to_vmem [thread:$0]  %s34, 4096, %s36, [#allocation6], 128, 128, 8
    $region17: #{tpu_custom_call.1} parent=1 // pred_fallthru
      _
    // Predicated region
    $region18: #{tpu_custom_call.1} parent=1 // pred_check
      _
    $region19: #{tpu_custom_call.1} parent=1 // pred_check_branch
      %43 = sbr.rel (0) target = $region21
    $region20: #{tpu_custom_call.1} parent=1 // pred_region
      %45 = vsyncadd [#allocation6], 0
      %s46 = sshll.u32 %s4, 4
      %s47 = int_to_ptr.hbm [resolvable:$true] %s46
      %s48 = sshll.u32 [#allocation7], 4
      %s49 = int_to_ptr.vmem [resolvable:$true] %s48
      %54 = dma.hbm_to_vmem [thread:$0]  %s47, 6144, %s49, [#allocation6], 128, 128, 8
    $region21: #{tpu_custom_call.1} parent=1 // pred_fallthru
      _
    // Predicated region
    $region22: #{tpu_custom_call.1} parent=1 // pred_check
      _
    $region23: #{tpu_custom_call.1} parent=1 // pred_check_branch
      %56 = sbr.rel (0) target = $region25
    $region24: #{tpu_custom_call.1} parent=1 // pred_region
      _
    $region25: #{tpu_custom_call.1} parent=1 // pred_fallthru
      _
    // Predicated region
    $region26: #{tpu_custom_call.1} parent=1 // pred_check
      _
    $region27: #{tpu_custom_call.1} parent=1 // pred_check_branch
      %58 = sbr.rel (0) target = $region29
    $region28: #{tpu_custom_call.1} parent=1 // pred_region
      %60 = dma.done [#allocation3], 256
    $region29: #{tpu_custom_call.1} parent=1 // pred_fallthru
      _
    // Predicated region
    $region30: #{tpu_custom_call.1} parent=1 // pred_check
      _
    $region31: #{tpu_custom_call.1} parent=1 // pred_check_branch
      %62 = sbr.rel (0) target = $region33
    $region32: #{tpu_custom_call.1} parent=1 // pred_region
      %64 = dma.done [#allocation6], 4096
    $region33: #{tpu_custom_call.1} parent=1 // pred_fallthru
      _
    // Predicated region
    $region34: #{tpu_custom_call.1} parent=1 // pred_check
      _
    $region35: #{tpu_custom_call.1} parent=1 // pred_check_branch
      %66 = sbr.rel (0) target = $region37
    $region36: #{tpu_custom_call.1} parent=1 // pred_region
      %68 = dma.done [#allocation6], 6144
    $region37: #{tpu_custom_call.1} parent=1 // pred_fallthru
      _
    %v69 = vld [vmem:[%s5] sm:$0x3]
    %v70 = vld [vmem:[%s5 + $0x2] sm:$0x1]
    %v71 = vld [vmem:[%s5 + $0x3] sm:$0x1]
    %v72 = vld [vmem:[%s5 + $0x4] sm:$0x1]
    %v73 = vld [vmem:[%s5 + $0x5] sm:$0x1]
    %v74 = vld [vmem:[%s1] sm:$0xff]
    %v75 = vld [vmem:[%s2] sm:$0xff]
    %77 = vset.pattern.permute.xlu0 0
    %78 = vperm.xlu0 %77, %v74
    %v79 = vpop.permute.xlu0 %78
    %v82 = vperm.slane %v75, 0
    %v83 = vperm.slane %v75, 4
    %v86 = vperm.slane %v82, 0
    %v87 = vperm.slane %v83, 0
    %v88 = vmul.f32 %v79, %v86
    %v89 = vmul.f32 %v79, %v87
    %v91 = vperm.slane %v69, 0
    %v92 = vperm.slane %v69, 1
    %v95 = vadd.f32 %v91, %v88
    %v96 = vadd.f32 %v92, %v89
    %97 = vset.pattern.permute.xlu0 1
    %98 = vperm.xlu0 %97, %v74
    %v99 = vpop.permute.xlu0 %98
    %v101 = vperm.slane %v75, 1
    %v102 = vperm.slane %v75, 5
    %v105 = vperm.slane %v101, 1
    %v106 = vperm.slane %v102, 1
    %v107 = vmul.f32 %v99, %v105
    %v108 = vmul.f32 %v99, %v106
    %v109 = vadd.f32 %v95, %v107
    %v110 = vadd.f32 %v96, %v108
    %111 = vset.pattern.permute.xlu0 2
    %112 = vperm.xlu0 %111, %v74
    %v113 = vpop.permute.xlu0 %112
    %v115 = vperm.slane %v75, 2
    %v116 = vperm.slane %v75, 6
    %v119 = vperm.slane %v115, 2
    %v120 = vperm.slane %v116, 2
    %v121 = vmul.f32 %v113, %v119
    %v122 = vmul.f32 %v113, %v120
    %v123 = vadd.f32 %v109, %v121
    %v124 = vadd.f32 %v110, %v122
    %125 = vset.pattern.permute.xlu0 3
    %126 = vperm.xlu0 %125, %v74
    %v127 = vpop.permute.xlu0 %126
    %v129 = vperm.slane %v75, 3
    %v130 = vperm.slane %v75, 7
    %v133 = vperm.slane %v129, 3
    %v134 = vperm.slane %v130, 3
    %v135 = vmul.f32 %v127, %v133
    %v136 = vmul.f32 %v127, %v134
    %v137 = vadd.f32 %v123, %v135
    %v138 = vadd.f32 %v124, %v136
    %v139 = vxor.u32 %v137, 2147483648
    %v140 = vxor.u32 %v138, 2147483648
    %v141 = vmul.f32 %v139, 1.442695
    %v142 = vpow.pop %v141
    %v143 = vmul.f32 %v140, 1.442695
    %v144 = vpow.pop %v143
    %v145 = vadd.f32 %v142, 1.0
    %v146 = vadd.f32 %v144, 1.0
    %v147 = vrcp.pop %v145
    %v148 = vmul.f32 %v145, %v147
    %v149 = vsub.f32 1.0, %v148
    %v150 = vmul.f32 %v147, %v149
    %v151 = vadd.f32 %v147, %v150
    %vm152 = vweird.f32 %v145
    %vm153 = vweird.f32 %v147
    %vm154 = vmor %vm152, %vm153
    %v155 = vsel %vm154, %v147, %v151
    %v156 = vand.u32 2147483647, %v145
    %vm157 = vcmp.eq.f32.partialorder %v156, 8.507059e+37
    %v158 = vand.u32 %v145, 2147483648
    %v159 = vor.u32 1.1754944e-38, %v158
    %v160 = vsel %vm157, %v159, %v155
    %v161 = vmul.f32 1.0, %v160
    %v162 = vrcp.pop %v146
    %v163 = vmul.f32 %v146, %v162
    %v164 = vsub.f32 1.0, %v163
    %v165 = vmul.f32 %v162, %v164
    %v166 = vadd.f32 %v162, %v165
    %vm167 = vweird.f32 %v146
    %vm168 = vweird.f32 %v162
    %vm169 = vmor %vm167, %vm168
    %v170 = vsel %vm169, %v162, %v166
    %v171 = vand.u32 2147483647, %v146
    %vm172 = vcmp.eq.f32.partialorder %v171, 8.507059e+37
    %v173 = vand.u32 %v146, 2147483648
    %v174 = vor.u32 1.1754944e-38, %v173
    %v175 = vsel %vm172, %v174, %v170
    %v176 = vmul.f32 1.0, %v175
    %v177 = vld [vmem:[#allocation2] sm:$0xff]
    %v178 = vld [vmem:[#allocation2 + $0x8] sm:$0xff]
    %v179 = vmul.f32 %v177, %v161
    %v180 = vmul.f32 %v178, %v176
    %v181 = vld [vmem:[#allocation5] sm:$0xff]
    %v182 = vld [vmem:[#allocation5 + $0x8] sm:$0xff]
    %v183 = vld [vmem:[#allocation5 + $0x10] sm:$0xff]
    %v184 = vld [vmem:[#allocation5 + $0x18] sm:$0xff]
    %v185 = vld [vmem:[#allocation5 + $0x20] sm:$0xff]
    %v186 = vld [vmem:[#allocation5 + $0x28] sm:$0xff]
    %v187 = vld [vmem:[#allocation5 + $0x30] sm:$0xff]
    %v188 = vld [vmem:[#allocation5 + $0x38] sm:$0xff]
    %v189 = vld [vmem:[#allocation5 + $0x40] sm:$0xff]
    %v190 = vld [vmem:[#allocation5 + $0x48] sm:$0xff]
    %v191 = vld [vmem:[#allocation5 + $0x50] sm:$0xff]
    %v192 = vld [vmem:[#allocation5 + $0x58] sm:$0xff]
    %v193 = vld [vmem:[#allocation5 + $0x60] sm:$0xff]
    %v194 = vld [vmem:[#allocation5 + $0x68] sm:$0xff]
    %v195 = vld [vmem:[#allocation5 + $0x70] sm:$0xff]
    %v196 = vld [vmem:[#allocation5 + $0x78] sm:$0xff]
    %v197 = vld [vmem:[#allocation5 + $0x80] sm:$0xff]
    %v198 = vld [vmem:[#allocation5 + $0x88] sm:$0xff]
    %v199 = vld [vmem:[#allocation5 + $0x90] sm:$0xff]
    %v200 = vld [vmem:[#allocation5 + $0x98] sm:$0xff]
    %v201 = vld [vmem:[#allocation5 + $0xa0] sm:$0xff]
    %v202 = vld [vmem:[#allocation5 + $0xa8] sm:$0xff]
    %v203 = vld [vmem:[#allocation5 + $0xb0] sm:$0xff]
    %v204 = vld [vmem:[#allocation5 + $0xb8] sm:$0xff]
    %v205 = vld [vmem:[#allocation5 + $0xc0] sm:$0xff]
    %v206 = vld [vmem:[#allocation5 + $0xc8] sm:$0xff]
    %v207 = vld [vmem:[#allocation5 + $0xd0] sm:$0xff]
    %v208 = vld [vmem:[#allocation5 + $0xd8] sm:$0xff]
    %v209 = vld [vmem:[#allocation5 + $0xe0] sm:$0xff]
    %v210 = vld [vmem:[#allocation5 + $0xe8] sm:$0xff]
    %v211 = vld [vmem:[#allocation5 + $0xf0] sm:$0xff]
    %v212 = vld [vmem:[#allocation5 + $0xf8] sm:$0xff]
    %v214 = vperm.slane %v70, 0
    %216 = vmatpush.msra.mxu0 %v196
    %217 = vmatpush.msra.mxu0 %v195
    %218 = vmatpush.msra.mxu0 %v194
    %219 = vmatpush.msra.mxu0 %v193
    %220 = vmatpush.msra.mxu0 %v192
    %221 = vmatpush.msra.mxu0 %v191
    %222 = vmatpush.msra.mxu0 %v190
    %223 = vmatpush.msra.mxu0 %v189
    %224 = vmatpush.msra.mxu0 %v188
    %225 = vmatpush.msra.mxu0 %v187
    %226 = vmatpush.msra.mxu0 %v186
    %227 = vmatpush.msra.mxu0 %v185
    %228 = vmatpush.msra.mxu0 %v184
    %229 = vmatpush.msra.mxu0 %v183
    %230 = vmatpush.msra.mxu0 %v182
    %231 = vmatpush.msra.mxu0 %v181
    %232 = vmatmul.f32.gmra.mxu0 %v179
    %v233 = vpop.f32.mrf.mxu0
    %v234 = vadd.f32 %v214, %v233
    %235 = vdwg.mxu0
    %236 = vmatpush.msra.mxu0 %v212
    %237 = vmatpush.msra.mxu0 %v211
    %238 = vmatpush.msra.mxu0 %v210
    %239 = vmatpush.msra.mxu0 %v209
    %240 = vmatpush.msra.mxu0 %v208
    %241 = vmatpush.msra.mxu0 %v207
    %242 = vmatpush.msra.mxu0 %v206
    %243 = vmatpush.msra.mxu0 %v205
    %244 = vmatpush.msra.mxu0 %v204
    %245 = vmatpush.msra.mxu0 %v203
    %246 = vmatpush.msra.mxu0 %v202
    %247 = vmatpush.msra.mxu0 %v201
    %248 = vmatpush.msra.mxu0 %v200
    %249 = vmatpush.msra.mxu0 %v199
    %250 = vmatpush.msra.mxu0 %v198
    %251 = vmatpush.msra.mxu0 %v197
    %252 = vmatmul.f32.gmra.mxu0 %v180
    %v253 = vpop.f32.mrf.mxu0
    %v254 = vadd.f32 %v234, %v253
    %255 = vdwg.mxu0
    %v256 = vmax.f32 %v254, 0.0
    %v257 = vld [vmem:[#allocation7] sm:$0xff]
    %v258 = vld [vmem:[#allocation7 + $0x8] sm:$0xff]
    %v259 = vld [vmem:[#allocation7 + $0x10] sm:$0xff]
    %v260 = vld [vmem:[#allocation7 + $0x18] sm:$0xff]
    %v261 = vld [vmem:[#allocation7 + $0x20] sm:$0xff]
    %v262 = vld [vmem:[#allocation7 + $0x28] sm:$0xff]
    %v263 = vld [vmem:[#allocation7 + $0x30] sm:$0xff]
    %v264 = vld [vmem:[#allocation7 + $0x38] sm:$0xff]
    %v265 = vld [vmem:[#allocation7 + $0x40] sm:$0xff]
    %v266 = vld [vmem:[#allocation7 + $0x48] sm:$0xff]
    %v267 = vld [vmem:[#allocation7 + $0x50] sm:$0xff]
    %v268 = vld [vmem:[#allocation7 + $0x58] sm:$0xff]
    %v269 = vld [vmem:[#allocation7 + $0x60] sm:$0xff]
    %v270 = vld [vmem:[#allocation7 + $0x68] sm:$0xff]
    %v271 = vld [vmem:[#allocation7 + $0x70] sm:$0xff]
    %v272 = vld [vmem:[#allocation7 + $0x78] sm:$0xff]
    %v274 = vperm.slane %v71, 0
    %276 = vmatpush.msra.mxu0 %v272
    %277 = vmatpush.msra.mxu0 %v271
    %278 = vmatpush.msra.mxu0 %v270
    %279 = vmatpush.msra.mxu0 %v269
    %280 = vmatpush.msra.mxu0 %v268
    %281 = vmatpush.msra.mxu0 %v267
    %282 = vmatpush.msra.mxu0 %v266
    %283 = vmatpush.msra.mxu0 %v265
    %284 = vmatpush.msra.mxu0 %v264
    %285 = vmatpush.msra.mxu0 %v263
    %286 = vmatpush.msra.mxu0 %v262
    %287 = vmatpush.msra.mxu0 %v261
    %288 = vmatpush.msra.mxu0 %v260
    %289 = vmatpush.msra.mxu0 %v259
    %290 = vmatpush.msra.mxu0 %v258
    %291 = vmatpush.msra.mxu0 %v257
    %292 = vmatmul.f32.gmra.mxu0 %v256
    %v293 = vpop.f32.mrf.mxu0
    %v294 = vadd.f32 %v274, %v293
    %295 = vdwg.mxu0
    %v296 = vmax.f32 %v294, 0.0
    %s297 = scalar_lea.vmem [#allocation7], 128
    %v298 = vld [vmem:[%s297] sm:$0xff]
    %v299 = vld [vmem:[%s297 + $0x8] sm:$0xff]
    %v300 = vld [vmem:[%s297 + $0x10] sm:$0xff]
    %v301 = vld [vmem:[%s297 + $0x18] sm:$0xff]
    %v302 = vld [vmem:[%s297 + $0x20] sm:$0xff]
    %v303 = vld [vmem:[%s297 + $0x28] sm:$0xff]
    %v304 = vld [vmem:[%s297 + $0x30] sm:$0xff]
    %v305 = vld [vmem:[%s297 + $0x38] sm:$0xff]
    %v306 = vld [vmem:[%s297 + $0x40] sm:$0xff]
    %v307 = vld [vmem:[%s297 + $0x48] sm:$0xff]
    %v308 = vld [vmem:[%s297 + $0x50] sm:$0xff]
    %v309 = vld [vmem:[%s297 + $0x58] sm:$0xff]
    %v310 = vld [vmem:[%s297 + $0x60] sm:$0xff]
    %v311 = vld [vmem:[%s297 + $0x68] sm:$0xff]
    %v312 = vld [vmem:[%s297 + $0x70] sm:$0xff]
    %v313 = vld [vmem:[%s297 + $0x78] sm:$0xff]
    %v315 = vperm.slane %v72, 0
    %317 = vmatpush.msra.mxu0 %v313
    %318 = vmatpush.msra.mxu0 %v312
    %319 = vmatpush.msra.mxu0 %v311
    %320 = vmatpush.msra.mxu0 %v310
    %321 = vmatpush.msra.mxu0 %v309
    %322 = vmatpush.msra.mxu0 %v308
    %323 = vmatpush.msra.mxu0 %v307
    %324 = vmatpush.msra.mxu0 %v306
    %325 = vmatpush.msra.mxu0 %v305
    %326 = vmatpush.msra.mxu0 %v304
    %327 = vmatpush.msra.mxu0 %v303
    %328 = vmatpush.msra.mxu0 %v302
    %329 = vmatpush.msra.mxu0 %v301
    %330 = vmatpush.msra.mxu0 %v300
    %331 = vmatpush.msra.mxu0 %v299
    %332 = vmatpush.msra.mxu0 %v298
    %333 = vmatmul.f32.gmra.mxu0 %v296
    %v334 = vpop.f32.mrf.mxu0
    %v335 = vadd.f32 %v315, %v334
    %336 = vdwg.mxu0
    %v337 = vmax.f32 %v335, 0.0
    %s338 = scalar_lea.vmem [#allocation7], 256
    %v339 = vld [vmem:[%s338] sm:$0xff]
    %v340 = vld [vmem:[%s338 + $0x8] sm:$0xff]
    %v341 = vld [vmem:[%s338 + $0x10] sm:$0xff]
    %v342 = vld [vmem:[%s338 + $0x18] sm:$0xff]
    %v343 = vld [vmem:[%s338 + $0x20] sm:$0xff]
    %v344 = vld [vmem:[%s338 + $0x28] sm:$0xff]
    %v345 = vld [vmem:[%s338 + $0x30] sm:$0xff]
    %v346 = vld [vmem:[%s338 + $0x38] sm:$0xff]
    %v347 = vld [vmem:[%s338 + $0x40] sm:$0xff]
    %v348 = vld [vmem:[%s338 + $0x48] sm:$0xff]
    %v349 = vld [vmem:[%s338 + $0x50] sm:$0xff]
    %v350 = vld [vmem:[%s338 + $0x58] sm:$0xff]
    %v351 = vld [vmem:[%s338 + $0x60] sm:$0xff]
    %v352 = vld [vmem:[%s338 + $0x68] sm:$0xff]
    %v353 = vld [vmem:[%s338 + $0x70] sm:$0xff]
    %v354 = vld [vmem:[%s338 + $0x78] sm:$0xff]
    %v356 = vperm.slane %v73, 0
    %358 = vmatpush.msra.mxu0 %v354
    %359 = vmatpush.msra.mxu0 %v353
    %360 = vmatpush.msra.mxu0 %v352
    %361 = vmatpush.msra.mxu0 %v351
    %362 = vmatpush.msra.mxu0 %v350
    %363 = vmatpush.msra.mxu0 %v349
    %364 = vmatpush.msra.mxu0 %v348
    %365 = vmatpush.msra.mxu0 %v347
    %366 = vmatpush.msra.mxu0 %v346
    %367 = vmatpush.msra.mxu0 %v345
    %368 = vmatpush.msra.mxu0 %v344
    %369 = vmatpush.msra.mxu0 %v343
    %370 = vmatpush.msra.mxu0 %v342
    %371 = vmatpush.msra.mxu0 %v341
    %372 = vmatpush.msra.mxu0 %v340
    %373 = vmatpush.msra.mxu0 %v339
    %374 = vmatmul.f32.gmra.mxu0 %v337
    %v375 = vpop.f32.mrf.mxu0
    %v376 = vadd.f32 %v356, %v375
    %377 = vdwg.mxu0
    %v378 = vtanh.pop %v376
    %379 = vst [vmem:[#allocation8] sm:$0xff] %v378
    // Predicated region
    $region38: #{tpu_custom_call.1} parent=1 // pred_check
      _
    $region39: #{tpu_custom_call.1} parent=1 // pred_check_branch
      %381 = sbr.rel (0) target = $region41
    $region40: #{tpu_custom_call.1} parent=1 // pred_region
      %383 = vsyncadd [#allocation4], 0
      %s385 = sshll.u32 [#allocation8], 4
      %s386 = int_to_ptr.vmem [resolvable:$true] %s385
      %s387 = sshll.u32 %s6, 4
      %s388 = int_to_ptr.hbm [resolvable:$true] %s387
      %390 = dma.vmem_to_hbm [thread:$0]  %s386, 128, %s388, [#allocation4]
    $region41: #{tpu_custom_call.1} parent=1 // pred_fallthru
      _
    // Predicated region
    $region42: #{tpu_custom_call.1} parent=1 // pred_check
      _
    $region43: #{tpu_custom_call.1} parent=1 // pred_check_branch
      %392 = sbr.rel (0) target = $region45
    $region44: #{tpu_custom_call.1} parent=1 // pred_region
      %394 = dma.done [#allocation4], 128
    $region45: #{tpu_custom_call.1} parent=1 // pred_fallthru
      _
    %395 = vsyncpa [#allocation3], 1
    %396 = vsyncpa [#allocation6], 1
    %397 = vsyncpa [#allocation4], 1

</llo_original>
